<compile_context>
chip_gen: v6e
topology: v6e:2x2x1
jax: 0.10.0
libtpu: 0.0.40
codegen_flags: <defaults>
</compile_context>

<pallas_src>
import math

import jax
import jax.numpy as jnp
from jax.experimental import pallas as pl
from jax.experimental.pallas import tpu as pltpu


def _round_up(x, m):
    return ((x + m - 1) // m) * m


def _vmem_budget_bytes():
    """Per-generation VMEM budget (leave compiler headroom under physical)."""
    try:
        kind = jax.devices()[0].device_kind.lower()
    except Exception:
        kind = ""
    if "v7" in kind:                      # v7x: 64 MiB physical VMEM per core
        return 48 * 1024 * 1024
    return 100 * 1024 * 1024              # v5e / v6e: 128 MiB physical VMEM


# ---------------------------------------------------------------------------
# Kernel 1: support = X @ W   (row-tiled; K and F_out whole per tile)
# ---------------------------------------------------------------------------
def _support_kernel(x_ref, w_ref, s_ref):
    s_ref[...] = jnp.dot(
        x_ref[...], w_ref[...], preferred_element_type=jnp.float32
    ).astype(s_ref.dtype)


# ---------------------------------------------------------------------------
# Kernel 2: out = adj @ support (+ bias)   (tiled over rows and contraction)
# ---------------------------------------------------------------------------
def _make_agg_kernel(has_bias, mask_k, n_valid, tk, compute_dtype):
    def kernel(adj_ref, s_ref, *rest):
        if has_bias:
            b_ref, o_ref, acc_ref = rest
        else:
            o_ref, acc_ref = rest

        k = pl.program_id(1)

        @pl.when(k == 0)
        def _():
            acc_ref[...] = jnp.zeros_like(acc_ref)

        # Stream adj in its original dtype; cast the tile on-chip (no extra
        # wrapper-side N^2 HBM pass).
        a = adj_ref[...].astype(compute_dtype)
        if mask_k:
            # Last contraction tile sticks out past N: zero the out-of-bounds
            # columns (matching support rows are zero-padded as well).
            col = k * tk + jax.lax.broadcasted_iota(jnp.int32, a.shape, 1)
            a = jnp.where(col < n_valid, a, jnp.zeros_like(a))

        acc_ref[...] += jnp.dot(a, s_ref[...],
                                preferred_element_type=jnp.float32)

        @pl.when(k == pl.num_programs(1) - 1)
        def _():
            out = acc_ref[...]
            if has_bias:
                out = out + b_ref[...]
            o_ref[...] = out.astype(o_ref.dtype)

    return kernel


def graph_convolution(x, adj, weight, bias=None, *,
                      compute_dtype=jnp.bfloat16,
                      row_tile=None, col_tile=None):
    """Pallas GCN layer: adj @ (x @ weight) [+ bias]. Output is float32."""
    n, f_in = x.shape
    k_w, f_out = weight.shape
    assert k_w == f_in, "weight first dim must match input feature dim"
    assert adj.shape == (n, n), "adjacency must be (N, N)"

    budget = _vmem_budget_bytes()
    cdt_size = jnp.dtype(compute_dtype).itemsize
    adj_itemsize = jnp.dtype(adj.dtype).itemsize

    # Lane-dense paddings (zero padding does not change the result).
    k_pad = _round_up(f_in, 128)
    f_out_pad = _round_up(f_out, 128)

    # ---- aggregation tiling: rows (TM) x contraction (TK) ------------------
    tm = 512 if row_tile is None else int(row_tile)
    tm = min(tm, n)
    if tm < n:
        tm = max(8, (tm // 8) * 8)
    grid_m = pl.cdiv(n, tm)

    # TK from the per-generation VMEM budget (adj double-buffer dominates).
    fixed = 3 * tm * f_out_pad * 4 + 2 * f_out_pad * 4 + (2 << 20)
    per_tk = 2 * tm * adj_itemsize + 2 * f_out_pad * cdt_size
    tk = max((budget - fixed) // per_tk, 128)
    if col_tile is not None:
        tk = min(tk, int(col_tile))
    if tk >= n:
        # Full contraction in one tile.  Keep the lane/sublane rules happy:
        # a non-multiple-of-8 N is only allowed when the support block spans
        # the full (small) support array.
        if n % 8 == 0 or n <= 4096:
            tk = n
        else:
            tk = max(128, (n // 128) * 128)
    else:
        tk = max(128, (tk // 128) * 128)
    grid_k = pl.cdiv(n, tk)
    n_k_pad = grid_k * tk               # support rows the aggregation reads
    needs_k_mask = (n % tk) != 0
    force_full_support = (tk % 8 != 0)  # tk == n with n not a multiple of 8

    # ---- support (X @ W) tiling --------------------------------------------
    if force_full_support:
        tms, grid_ms = n_k_pad, 1
    else:
        fixed_s = 2 * k_pad * f_out_pad * cdt_size + (2 << 20)
        per_tms = 2 * k_pad * cdt_size + 2 * f_out_pad * cdt_size
        tms = max((budget - fixed_s) // per_tms, 8)
        tms = min(tms, 1024, n_k_pad)
        if tms < n_k_pad:
            tms = max(8, (tms // 8) * 8)
            grid_ms = pl.cdiv(n_k_pad, tms)
        else:
            tms, grid_ms = n_k_pad, 1
    n_x_pad = grid_ms * tms             # >= n_k_pad; extra support rows = 0

    # ---- cheap wrapper-side prep (only O(N*F) arrays; never the N^2 adj) ---
    x_c = jnp.pad(x.astype(compute_dtype),
                  ((0, n_x_pad - n), (0, k_pad - f_in)))
    w_c = jnp.pad(weight.astype(compute_dtype),
                  ((0, k_pad - f_in), (0, f_out_pad - f_out)))

    support = pl.pallas_call(
        _support_kernel,
        out_shape=jax.ShapeDtypeStruct((n_x_pad, f_out_pad), compute_dtype),
        grid_spec=pltpu.PrefetchScalarGridSpec(
            num_scalar_prefetch=0,
            grid=(grid_ms,),
            in_specs=[pl.BlockSpec((tms, k_pad), lambda i: (i, 0)),
                      pl.BlockSpec((k_pad, f_out_pad), lambda i: (0, 0))],
            out_specs=pl.BlockSpec((tms, f_out_pad), lambda i: (i, 0)),
        ),
        compiler_params=pltpu.CompilerParams(
            dimension_semantics=("parallel",),
            vmem_limit_bytes=budget,
        ),
        cost_estimate=pl.CostEstimate(
            flops=2 * n_x_pad * k_pad * f_out_pad,
            transcendentals=0,
            bytes_accessed=(n_x_pad * k_pad + k_pad * f_out_pad
                            + n_x_pad * f_out_pad) * cdt_size),
    )(x_c, w_c)

    # ---- aggregation: out = adj @ support (+ bias) --------------------------
    has_bias = bias is not None
    kernel = _make_agg_kernel(has_bias, needs_k_mask, n, tk, compute_dtype)

    in_specs = [
        pl.BlockSpec((tm, tk), lambda i, k: (i, k)),         # adj (streamed, f32)
        pl.BlockSpec((tk, f_out_pad), lambda i, k: (k, 0)),  # support (streamed)
    ]
    operands = [adj, support]
    if has_bias:
        in_specs.append(pl.BlockSpec((1, f_out_pad), lambda i, k: (0, 0)))
        operands.append(
            jnp.pad(bias.astype(jnp.float32),
                    (0, f_out_pad - f_out)).reshape(1, f_out_pad))

    out = pl.pallas_call(
        kernel,
        out_shape=jax.ShapeDtypeStruct((n, f_out_pad), jnp.float32),
        grid_spec=pltpu.PrefetchScalarGridSpec(
            num_scalar_prefetch=0,
            grid=(grid_m, grid_k),
            in_specs=in_specs,
            out_specs=pl.BlockSpec((tm, f_out_pad), lambda i, k: (i, 0)),
            scratch_shapes=[pltpu.VMEM((tm, f_out_pad), jnp.float32)],
        ),
        compiler_params=pltpu.CompilerParams(
            # Row tiles are independent -> "parallel" (v7x's two TensorCores
            # split them); contraction carries the accumulator -> "arbitrary".
            dimension_semantics=("parallel", "arbitrary"),
            vmem_limit_bytes=budget,
        ),
        cost_estimate=pl.CostEstimate(
            flops=2 * n * n_k_pad * f_out_pad,
            transcendentals=0,
            bytes_accessed=(n * n * adj_itemsize
                            + n_k_pad * f_out_pad * cdt_size
                            + n * f_out_pad * 4 + f_out_pad * 4)),
    )(*operands)

    if f_out_pad != f_out:
        out = out[:, :f_out]
    return out


if __name__ == "__main__":
    # Small but tiling-exercising shapes: 512 nodes, 64 in-features (padded to
    # 128), 96 out-features (padded to 128 and sliced back).
    N, F_IN, F_OUT = 512, 64, 96

    key = jax.random.PRNGKey(0)
    k_x, k_adj, k_w, k_b = jax.random.split(key, 4)

    # Parameter init mirroring reset_parameters(): uniform(-stdv, stdv),
    # stdv = 1/sqrt(out_features).
    stdv = 1.0 / math.sqrt(F_OUT)
    weight = jax.random.uniform(k_w, (F_IN, F_OUT), jnp.float32, -stdv, stdv)
    bias = jax.random.uniform(k_b, (F_OUT,), jnp.float32, -stdv, stdv)

    # Node features and a dense, row-normalized adjacency (spmm treated dense).
    x = jax.random.normal(k_x, (N, F_IN), jnp.float32)
    adj_raw = jax.random.uniform(k_adj, (N, N), jnp.float32)
    adj = (adj_raw > 0.95).astype(jnp.float32) + jnp.eye(N, dtype=jnp.float32)
    adj = adj / jnp.sum(adj, axis=1, keepdims=True)

    ref = adj @ (x @ weight) + bias[None, :]
    ref_nb = adj @ (x @ weight)

    # 1) bias path, clean tiling: grid_m=4, grid_k=2 (no K remainder).
    out = jax.block_until_ready(
        graph_convolution(x, adj, weight, bias, row_tile=128, col_tile=256))
    assert out.shape == (N, F_OUT)
    assert jnp.allclose(out, ref, atol=5e-2, rtol=5e-2), (
        "bias path mismatch, max abs err = %f"
        % float(jnp.max(jnp.abs(out - ref))))

    # 2) no-bias path, default (budget-derived) tiles: full blocks, grid (1,1).
    out_nb = jax.block_until_ready(graph_convolution(x, adj, weight, None))
    assert jnp.allclose(out_nb, ref_nb, atol=5e-2, rtol=5e-2), (
        "no-bias path mismatch, max abs err = %f"
        % float(jnp.max(jnp.abs(out_nb - ref_nb))))

    # 3) bias path with row and contraction remainders (masked last K tile).
    out_r = jax.block_until_ready(
        graph_convolution(x, adj, weight, bias, row_tile=192, col_tile=384))
    assert jnp.allclose(out_r, ref, atol=5e-2, rtol=5e-2), (
        "remainder-tiling path mismatch, max abs err = %f"
        % float(jnp.max(jnp.abs(out_r - ref))))

    print("KERNEL_OK")
</pallas_src>

<mosaic_0001>
module attributes {stable_mosaic.version = 11 : i64} {
  func.func @_support_kernel(%arg0: i32, %arg1: memref<512x128xbf16, #tpu.memory_space<vmem>>, %arg2: memref<128x128xbf16, #tpu.memory_space<vmem>>, %arg3: memref<512x128xbf16, #tpu.memory_space<vmem>>) attributes {dimension_semantics = [#tpu.dimension_semantics<parallel>], iteration_bounds = array<i64: 1>, scalar_prefetch = 0 : i64, scratch_operands = 0 : i64, tpu.core_type = #tpu.core_type<tc>, window_params = [{transform_indices = @transform_0, window_bounds = array<i64: 512, 128>}, {pipeline_mode = #tpu.pipeline_mode<synchronous>, transform_indices = @transform_1, window_bounds = array<i64: 128, 128>}, {transform_indices = @transform_2, window_bounds = array<i64: 512, 128>}]} {
    %c0 = arith.constant 0 : index
    %c0_0 = arith.constant 0 : index
    %0 = vector.load %arg1[%c0, %c0_0] : memref<512x128xbf16, #tpu.memory_space<vmem>>, vector<512x128xbf16>
    %c0_1 = arith.constant 0 : index
    %c0_2 = arith.constant 0 : index
    %1 = vector.load %arg2[%c0_1, %c0_2] : memref<128x128xbf16, #tpu.memory_space<vmem>>, vector<128x128xbf16>
    %cst = arith.constant dense<0.000000e+00> : vector<512x128xf32>
    %2 = tpu.matmul %0, %1, %cst {dimension_numbers = #tpu.dot_dimension_numbers<[1], [0], [0], [1], [0, 0, 1, 1], [], []>} : vector<512x128xbf16>, vector<128x128xbf16>, vector<512x128xf32> -> vector<512x128xf32>
    %3 = arith.truncf %2 : vector<512x128xf32> to vector<512x128xbf16>
    %c0_3 = arith.constant 0 : index
    %c0_4 = arith.constant 0 : index
    %4 = vector.load %arg3[%c0_3, %c0_4] : memref<512x128xbf16, #tpu.memory_space<vmem>>, vector<512x128xbf16>
    tpu.vector_store %arg3[%c0_3, %c0_4], %3 {strides = array<i32>} : memref<512x128xbf16, #tpu.memory_space<vmem>>, vector<512x128xbf16>,
    return
  }
  func.func @transform_0(%arg0: i32) -> (i32, i32) {
    %c0_i32 = arith.constant 0 : i32
    %c0_i32_0 = arith.constant 0 : i32
    return %arg0, %c0_i32 : i32, i32
  }
  func.func @transform_1(%arg0: i32) -> (i32, i32) {
    %c0_i32 = arith.constant 0 : i32
    %c0_i32_0 = arith.constant 0 : i32
    %c0_i32_1 = arith.constant 0 : i32
    return %c0_i32, %c0_i32_0 : i32, i32
  }
  func.func @transform_2(%arg0: i32) -> (i32, i32) {
    %c0_i32 = arith.constant 0 : i32
    %c0_i32_0 = arith.constant 0 : i32
    return %arg0, %c0_i32 : i32, i32
  }
}

</mosaic_0001>

<llo_original>
// kernel: tpu_custom_call.1
$region0: #{tpu_custom_call.1}
  #allocation0 [shape = 'u32[]', space=smem, size = 0x4, offset = 0x4, fixed_abs, tag = 'smem constant byte address 0x4 - core index']
  #allocation1 [shape = 'u32[144,128]{1,0:T(1,128)}', space=vmem, size = 0x12000, scoped, tag = 'internal scratch']
  %s0 = inlined_call_operand.hbm [shape: bf16[512,128], index: 0, kind: input, shape index: {}]
  %s1 = inlined_call_operand.hbm [shape: bf16[128,128], index: 1, kind: input, shape index: {}]
  %s2 = inlined_call_operand.hbm [shape: bf16[512,128], index: 2, kind: output, shape index: {}]
  %s3 = sld [smem:[#allocation0]]
  $region26: #{tpu_custom_call.1} parent=0
    _
  %s5 = ssub.s32 1, %s3
  %s6 = scalar_select 0, %s5, %s3
  $region1: #{tpu_custom_call.1} parent=0
    #allocation2 [shape = 'u8[131072]{0}', space=vmem, size = 0x20000, scoped, tag = 'input window, operand 0, single buffered']
    #allocation3 [shape = 's32[1]{0}', space=sflag, size = 0x4, scoped, tag = 'scoped memory for tpu_custom_call.1']
    #allocation4 [shape = 's32[1]{0}', space=sflag, size = 0x4, scoped, tag = 'scoped memory for tpu_custom_call.1']
    #allocation5 [shape = 'u8[32768]{0}', space=vmem, size = 0x8000, scoped, tag = 'input window, operand 1, single buffered']
    #allocation6 [shape = 's32[1]{0}', space=sflag, size = 0x4, scoped, tag = 'scoped memory for tpu_custom_call.1']
    #allocation7 [shape = 'u8[131072]{0}', space=vmem, size = 0x20000, scoped, tag = 'output window, operand 0, single buffered']
    %7 = vsyncpa [#allocation3], 0
    %8 = vsyncpa [#allocation6], 0
    %9 = vsyncpa [#allocation4], 0
    // Predicated region
    $region2: #{tpu_custom_call.1} parent=1 // pred_check
      _
    $region3: #{tpu_custom_call.1} parent=1 // pred_check_branch
      %11 = sbr.rel (0) target = $region5
    $region4: #{tpu_custom_call.1} parent=1 // pred_region
      %s13 = ssub.s32 4096, 4096
      %14 = vsyncadd [#allocation3], %s13
      %s15 = sshll.u32 [#allocation2], 4
      %s16 = int_to_ptr.vmem [resolvable:$true] %s15
      %21 = dma.hbm_to_vmem [thread:$0]  %s0, 4096, %s16, [#allocation3], 64, 64, 4
    $region5: #{tpu_custom_call.1} parent=1 // pred_fallthru
      _
    // Predicated region
    $region6: #{tpu_custom_call.1} parent=1 // pred_check
      _
    $region7: #{tpu_custom_call.1} parent=1 // pred_check_branch
      %23 = sbr.rel (0) target = $region9
    $region8: #{tpu_custom_call.1} parent=1 // pred_region
      %s25 = ssub.s32 1024, 1024
      %26 = vsyncadd [#allocation6], %s25
      %s27 = sshll.u32 [#allocation5], 4
      %s28 = int_to_ptr.vmem [resolvable:$true] %s27
      %33 = dma.hbm_to_vmem [thread:$0]  %s1, 1024, %s28, [#allocation6], 64, 64, 4
    $region9: #{tpu_custom_call.1} parent=1 // pred_fallthru
      _
    // Predicated region
    $region10: #{tpu_custom_call.1} parent=1 // pred_check
      _
    $region11: #{tpu_custom_call.1} parent=1 // pred_check_branch
      %35 = sbr.rel (0) target = $region13
    $region12: #{tpu_custom_call.1} parent=1 // pred_region
      %36 = dma.done [#allocation3], 4096
    $region13: #{tpu_custom_call.1} parent=1 // pred_fallthru
      _
    // Predicated region
    $region14: #{tpu_custom_call.1} parent=1 // pred_check
      _
    $region15: #{tpu_custom_call.1} parent=1 // pred_check_branch
      %38 = sbr.rel (0) target = $region17
    $region16: #{tpu_custom_call.1} parent=1 // pred_region
      %39 = dma.done [#allocation6], 1024
    $region17: #{tpu_custom_call.1} parent=1 // pred_fallthru
      _
    %v41 = vld [vmem:[#allocation2] sm:$0xf]
    %v42 = vld [vmem:[#allocation2 + $0x4] sm:$0xf]
    %v43 = vld [vmem:[#allocation2 + $0x8] sm:$0xf]
    %v44 = vld [vmem:[#allocation2 + $0xc] sm:$0xf]
    %v45 = vld [vmem:[#allocation2 + $0x10] sm:$0xf]
    %v46 = vld [vmem:[#allocation2 + $0x14] sm:$0xf]
    %v47 = vld [vmem:[#allocation2 + $0x18] sm:$0xf]
    %v48 = vld [vmem:[#allocation2 + $0x1c] sm:$0xf]
    %v49 = vld [vmem:[#allocation2 + $0x20] sm:$0xf]
    %v50 = vld [vmem:[#allocation2 + $0x24] sm:$0xf]
    %v51 = vld [vmem:[#allocation2 + $0x28] sm:$0xf]
    %v52 = vld [vmem:[#allocation2 + $0x2c] sm:$0xf]
    %v53 = vld [vmem:[#allocation2 + $0x30] sm:$0xf]
    %v54 = vld [vmem:[#allocation2 + $0x34] sm:$0xf]
    %v55 = vld [vmem:[#allocation2 + $0x38] sm:$0xf]
    %v56 = vld [vmem:[#allocation2 + $0x3c] sm:$0xf]
    %v57 = vld [vmem:[#allocation2 + $0x40] sm:$0xf]
    %v58 = vld [vmem:[#allocation2 + $0x44] sm:$0xf]
    %v59 = vld [vmem:[#allocation2 + $0x48] sm:$0xf]
    %v60 = vld [vmem:[#allocation2 + $0x4c] sm:$0xf]
    %v61 = vld [vmem:[#allocation2 + $0x50] sm:$0xf]
    %v62 = vld [vmem:[#allocation2 + $0x54] sm:$0xf]
    %v63 = vld [vmem:[#allocation2 + $0x58] sm:$0xf]
    %v64 = vld [vmem:[#allocation2 + $0x5c] sm:$0xf]
    %v65 = vld [vmem:[#allocation2 + $0x60] sm:$0xf]
    %v66 = vld [vmem:[#allocation2 + $0x64] sm:$0xf]
    %v67 = vld [vmem:[#allocation2 + $0x68] sm:$0xf]
    %v68 = vld [vmem:[#allocation2 + $0x6c] sm:$0xf]
    %v69 = vld [vmem:[#allocation2 + $0x70] sm:$0xf]
    %v70 = vld [vmem:[#allocation2 + $0x74] sm:$0xf]
    %v71 = vld [vmem:[#allocation2 + $0x78] sm:$0xf]
    %v72 = vld [vmem:[#allocation2 + $0x7c] sm:$0xf]
    %v73 = vld [vmem:[#allocation2 + $0x80] sm:$0xf]
    %v74 = vld [vmem:[#allocation2 + $0x84] sm:$0xf]
    %v75 = vld [vmem:[#allocation2 + $0x88] sm:$0xf]
    %v76 = vld [vmem:[#allocation2 + $0x8c] sm:$0xf]
    %v77 = vld [vmem:[#allocation2 + $0x90] sm:$0xf]
    %v78 = vld [vmem:[#allocation2 + $0x94] sm:$0xf]
    %v79 = vld [vmem:[#allocation2 + $0x98] sm:$0xf]
    %v80 = vld [vmem:[#allocation2 + $0x9c] sm:$0xf]
    %v81 = vld [vmem:[#allocation2 + $0xa0] sm:$0xf]
    %v82 = vld [vmem:[#allocation2 + $0xa4] sm:$0xf]
    %v83 = vld [vmem:[#allocation2 + $0xa8] sm:$0xf]
    %v84 = vld [vmem:[#allocation2 + $0xac] sm:$0xf]
    %v85 = vld [vmem:[#allocation2 + $0xb0] sm:$0xf]
    %v86 = vld [vmem:[#allocation2 + $0xb4] sm:$0xf]
    %v87 = vld [vmem:[#allocation2 + $0xb8] sm:$0xf]
    %v88 = vld [vmem:[#allocation2 + $0xbc] sm:$0xf]
    %v89 = vld [vmem:[#allocation2 + $0xc0] sm:$0xf]
    %v90 = vld [vmem:[#allocation2 + $0xc4] sm:$0xf]
    %v91 = vld [vmem:[#allocation2 + $0xc8] sm:$0xf]
    %v92 = vld [vmem:[#allocation2 + $0xcc] sm:$0xf]
    %v93 = vld [vmem:[#allocation2 + $0xd0] sm:$0xf]
    %v94 = vld [vmem:[#allocation2 + $0xd4] sm:$0xf]
    %v95 = vld [vmem:[#allocation2 + $0xd8] sm:$0xf]
    %v96 = vld [vmem:[#allocation2 + $0xdc] sm:$0xf]
    %v97 = vld [vmem:[#allocation2 + $0xe0] sm:$0xf]
    %v98 = vld [vmem:[#allocation2 + $0xe4] sm:$0xf]
    %v99 = vld [vmem:[#allocation2 + $0xe8] sm:$0xf]
    %v100 = vld [vmem:[#allocation2 + $0xec] sm:$0xf]
    %v101 = vld [vmem:[#allocation2 + $0xf0] sm:$0xf]
    %v102 = vld [vmem:[#allocation2 + $0xf4] sm:$0xf]
    %v103 = vld [vmem:[#allocation2 + $0xf8] sm:$0xf]
    %v104 = vld [vmem:[#allocation2 + $0xfc] sm:$0xf]
    %v105 = vld [vmem:[#allocation5] sm:$0xf]
    %v106 = vld [vmem:[#allocation5 + $0x4] sm:$0xf]
    %v107 = vld [vmem:[#allocation5 + $0x8] sm:$0xf]
    %v108 = vld [vmem:[#allocation5 + $0xc] sm:$0xf]
    %v109 = vld [vmem:[#allocation5 + $0x10] sm:$0xf]
    %v110 = vld [vmem:[#allocation5 + $0x14] sm:$0xf]
    %v111 = vld [vmem:[#allocation5 + $0x18] sm:$0xf]
    %v112 = vld [vmem:[#allocation5 + $0x1c] sm:$0xf]
    %v113 = vld [vmem:[#allocation5 + $0x20] sm:$0xf]
    %v114 = vld [vmem:[#allocation5 + $0x24] sm:$0xf]
    %v115 = vld [vmem:[#allocation5 + $0x28] sm:$0xf]
    %v116 = vld [vmem:[#allocation5 + $0x2c] sm:$0xf]
    %v117 = vld [vmem:[#allocation5 + $0x30] sm:$0xf]
    %v118 = vld [vmem:[#allocation5 + $0x34] sm:$0xf]
    %v119 = vld [vmem:[#allocation5 + $0x38] sm:$0xf]
    %v120 = vld [vmem:[#allocation5 + $0x3c] sm:$0xf]
    %v185 = vunpack.c.l.b16 %v41
    %v186 = vunpack.c.l.b16 %v42
    %v187 = vunpack.c.l.b16 %v43
    %v188 = vunpack.c.l.b16 %v44
    %v189 = vunpack.c.l.b16 %v45
    %v190 = vunpack.c.l.b16 %v46
    %v191 = vunpack.c.l.b16 %v47
    %v192 = vunpack.c.l.b16 %v48
    %v193 = vunpack.c.l.b16 %v49
    %v194 = vunpack.c.l.b16 %v50
    %v195 = vunpack.c.l.b16 %v51
    %v196 = vunpack.c.l.b16 %v52
    %v197 = vunpack.c.l.b16 %v53
    %v198 = vunpack.c.l.b16 %v54
    %v199 = vunpack.c.l.b16 %v55
    %v200 = vunpack.c.l.b16 %v56
    %v201 = vunpack.c.l.b16 %v57
    %v202 = vunpack.c.l.b16 %v58
    %v203 = vunpack.c.l.b16 %v59
    %v204 = vunpack.c.l.b16 %v60
    %v205 = vunpack.c.l.b16 %v61
    %v206 = vunpack.c.l.b16 %v62
    %v207 = vunpack.c.l.b16 %v63
    %v208 = vunpack.c.l.b16 %v64
    %v209 = vunpack.c.l.b16 %v65
    %v210 = vunpack.c.l.b16 %v66
    %v211 = vunpack.c.l.b16 %v67
    %v212 = vunpack.c.l.b16 %v68
    %v213 = vunpack.c.l.b16 %v69
    %v214 = vunpack.c.l.b16 %v70
    %v215 = vunpack.c.l.b16 %v71
    %v216 = vunpack.c.l.b16 %v72
    %v217 = vunpack.c.l.b16 %v73
    %v218 = vunpack.c.l.b16 %v74
    %v219 = vunpack.c.l.b16 %v75
    %v220 = vunpack.c.l.b16 %v76
    %v221 = vunpack.c.l.b16 %v77
    %v222 = vunpack.c.l.b16 %v78
    %v223 = vunpack.c.l.b16 %v79
    %v224 = vunpack.c.l.b16 %v80
    %v225 = vunpack.c.l.b16 %v81
    %v226 = vunpack.c.l.b16 %v82
    %v227 = vunpack.c.l.b16 %v83
    %v228 = vunpack.c.l.b16 %v84
    %v229 = vunpack.c.l.b16 %v85
    %v230 = vunpack.c.l.b16 %v86
    %v231 = vunpack.c.l.b16 %v87
    %v232 = vunpack.c.l.b16 %v88
    %v233 = vunpack.c.l.b16 %v89
    %v234 = vunpack.c.l.b16 %v90
    %v235 = vunpack.c.l.b16 %v91
    %v236 = vunpack.c.l.b16 %v92
    %v237 = vunpack.c.l.b16 %v93
    %v238 = vunpack.c.l.b16 %v94
    %v239 = vunpack.c.l.b16 %v95
    %v240 = vunpack.c.l.b16 %v96
    %v241 = vunpack.c.l.b16 %v97
    %v242 = vunpack.c.l.b16 %v98
    %v243 = vunpack.c.l.b16 %v99
    %v244 = vunpack.c.l.b16 %v100
    %v245 = vunpack.c.l.b16 %v101
    %v246 = vunpack.c.l.b16 %v102
    %v247 = vunpack.c.l.b16 %v103
    %v248 = vunpack.c.l.b16 %v104
    %v249 = vpack.c.b16 %v186, %v185
    %v250 = vpack.c.b16 %v188, %v187
    %v251 = vpack.c.b16 %v190, %v189
    %v252 = vpack.c.b16 %v192, %v191
    %v253 = vpack.c.b16 %v194, %v193
    %v254 = vpack.c.b16 %v196, %v195
    %v255 = vpack.c.b16 %v198, %v197
    %v256 = vpack.c.b16 %v200, %v199
    %v257 = vpack.c.b16 %v202, %v201
    %v258 = vpack.c.b16 %v204, %v203
    %v259 = vpack.c.b16 %v206, %v205
    %v260 = vpack.c.b16 %v208, %v207
    %v261 = vpack.c.b16 %v210, %v209
    %v262 = vpack.c.b16 %v212, %v211
    %v263 = vpack.c.b16 %v214, %v213
    %v264 = vpack.c.b16 %v216, %v215
    %v265 = vpack.c.b16 %v218, %v217
    %v266 = vpack.c.b16 %v220, %v219
    %v267 = vpack.c.b16 %v222, %v221
    %v268 = vpack.c.b16 %v224, %v223
    %v269 = vpack.c.b16 %v226, %v225
    %v270 = vpack.c.b16 %v228, %v227
    %v271 = vpack.c.b16 %v230, %v229
    %v272 = vpack.c.b16 %v232, %v231
    %v273 = vpack.c.b16 %v234, %v233
    %v274 = vpack.c.b16 %v236, %v235
    %v275 = vpack.c.b16 %v238, %v237
    %v276 = vpack.c.b16 %v240, %v239
    %v277 = vpack.c.b16 %v242, %v241
    %v278 = vpack.c.b16 %v244, %v243
    %v279 = vpack.c.b16 %v246, %v245
    %v280 = vpack.c.b16 %v248, %v247
    %v329 = vunpack.c.l.b16 %v105
    %v330 = vunpack.c.l.b16 %v106
    %v331 = vunpack.c.l.b16 %v107
    %v332 = vunpack.c.l.b16 %v108
    %v333 = vunpack.c.l.b16 %v109
    %v334 = vunpack.c.l.b16 %v110
    %v335 = vunpack.c.l.b16 %v111
    %v336 = vunpack.c.l.b16 %v112
    %v337 = vunpack.c.l.b16 %v113
    %v338 = vunpack.c.l.b16 %v114
    %v339 = vunpack.c.l.b16 %v115
    %v340 = vunpack.c.l.b16 %v116
    %v341 = vunpack.c.l.b16 %v117
    %v342 = vunpack.c.l.b16 %v118
    %v343 = vunpack.c.l.b16 %v119
    %v344 = vunpack.c.l.b16 %v120
    %v345 = vpack.c.b16 %v330, %v329
    %v346 = vpack.c.b16 %v332, %v331
    %v347 = vpack.c.b16 %v334, %v333
    %v348 = vpack.c.b16 %v336, %v335
    %v349 = vpack.c.b16 %v338, %v337
    %v350 = vpack.c.b16 %v340, %v339
    %v351 = vpack.c.b16 %v342, %v341
    %v352 = vpack.c.b16 %v344, %v343
    %361 = vmatprep.subr.bf16.mxu0 0
    %362 = vmatpush1.bf16.msra.mxu0 %v352
    %363 = vmatprep.subr.bf16.mxu0 0
    %364 = vmatpush1.bf16.msra.mxu0 %v351
    %365 = vmatprep.subr.bf16.mxu0 0
    %366 = vmatpush1.bf16.msra.mxu0 %v350
    %367 = vmatprep.subr.bf16.mxu0 0
    %368 = vmatpush1.bf16.msra.mxu0 %v349
    %369 = vmatprep.subr.bf16.mxu0 0
    %370 = vmatpush1.bf16.msra.mxu0 %v348
    %371 = vmatprep.subr.bf16.mxu0 0
    %372 = vmatpush1.bf16.msra.mxu0 %v347
    %373 = vmatprep.subr.bf16.mxu0 0
    %374 = vmatpush1.bf16.msra.mxu0 %v346
    %375 = vmatprep.subr.bf16.mxu0 0
    %376 = vmatpush1.bf16.msra.mxu0 %v345
    %377 = vmatprep.subr.bf16.mxu0 0
    %378 = vmatpush2.bf16.msra.mxu0 0
    %379 = vmatprep.subr.bf16.mxu0 0
    %380 = vmatpush2.bf16.msra.mxu0 0
    %381 = vmatprep.subr.bf16.mxu0 0
    %382 = vmatpush2.bf16.msra.mxu0 0
    %383 = vmatprep.subr.bf16.mxu0 0
    %384 = vmatpush2.bf16.msra.mxu0 0
    %385 = vmatprep.subr.bf16.mxu0 0
    %386 = vmatpush2.bf16.msra.mxu0 0
    %387 = vmatprep.subr.bf16.mxu0 0
    %388 = vmatpush2.bf16.msra.mxu0 0
    %389 = vmatprep.subr.bf16.mxu0 0
    %390 = vmatpush2.bf16.msra.mxu0 0
    %391 = vmatprep.subr.bf16.mxu0 0
    %392 = vmatpush2.bf16.msra.mxu0 0
    %393 = vmatprep.mubr.bf16.mxu0 0
    %394 = vmatmul.mubr.bf16.gmra.mxu0 %v249
    %v395 = vpop.f32.mrf.mxu0
    %v396 = vadd.f32 0.0, %v395
    %v397 = vpop.f32.mrf.mxu0
    %v398 = vpop.f32.mrf.mxu0
    %v399 = vadd.f32 0.0, %v398
    %v400 = vpop.f32.mrf.mxu0
    %401 = vmatprep.mubr.bf16.mxu0 0
    %402 = vmatmul.mubr.bf16.gmra.mxu0 %v250
    %v403 = vpop.f32.mrf.mxu0
    %v404 = vadd.f32 0.0, %v403
    %v405 = vpop.f32.mrf.mxu0
    %v406 = vpop.f32.mrf.mxu0
    %v407 = vadd.f32 0.0, %v406
    %v408 = vpop.f32.mrf.mxu0
    %409 = vmatprep.mubr.bf16.mxu0 0
    %410 = vmatmul.mubr.bf16.gmra.mxu0 %v251
    %v411 = vpop.f32.mrf.mxu0
    %v412 = vadd.f32 0.0, %v411
    %v413 = vpop.f32.mrf.mxu0
    %v414 = vpop.f32.mrf.mxu0
    %v415 = vadd.f32 0.0, %v414
    %v416 = vpop.f32.mrf.mxu0
    %417 = vmatprep.mubr.bf16.mxu0 0
    %418 = vmatmul.mubr.bf16.gmra.mxu0 %v252
    %v419 = vpop.f32.mrf.mxu0
    %v420 = vadd.f32 0.0, %v419
    %v421 = vpop.f32.mrf.mxu0
    %v422 = vpop.f32.mrf.mxu0
    %v423 = vadd.f32 0.0, %v422
    %v424 = vpop.f32.mrf.mxu0
    %425 = vmatprep.mubr.bf16.mxu0 0
    %426 = vmatmul.mubr.bf16.gmra.mxu0 %v253
    %v427 = vpop.f32.mrf.mxu0
    %v428 = vadd.f32 0.0, %v427
    %v429 = vpop.f32.mrf.mxu0
    %v430 = vpop.f32.mrf.mxu0
    %v431 = vadd.f32 0.0, %v430
    %v432 = vpop.f32.mrf.mxu0
    %433 = vmatprep.mubr.bf16.mxu0 0
    %434 = vmatmul.mubr.bf16.gmra.mxu0 %v254
    %v435 = vpop.f32.mrf.mxu0
    %v436 = vadd.f32 0.0, %v435
    %v437 = vpop.f32.mrf.mxu0
    %v438 = vpop.f32.mrf.mxu0
    %v439 = vadd.f32 0.0, %v438
    %v440 = vpop.f32.mrf.mxu0
    %441 = vmatprep.mubr.bf16.mxu0 0
    %442 = vmatmul.mubr.bf16.gmra.mxu0 %v255
    %v443 = vpop.f32.mrf.mxu0
    %v444 = vadd.f32 0.0, %v443
    %v445 = vpop.f32.mrf.mxu0
    %v446 = vpop.f32.mrf.mxu0
    %v447 = vadd.f32 0.0, %v446
    %v448 = vpop.f32.mrf.mxu0
    %449 = vmatprep.mubr.bf16.mxu0 0
    %450 = vmatmul.mubr.bf16.gmra.mxu0 %v256
    %v451 = vpop.f32.mrf.mxu0
    %v452 = vadd.f32 0.0, %v451
    %v453 = vpop.f32.mrf.mxu0
    %v454 = vpop.f32.mrf.mxu0
    %v455 = vadd.f32 0.0, %v454
    %v456 = vpop.f32.mrf.mxu0
    %457 = vmatprep.mubr.bf16.mxu0 0
    %458 = vmatmul.mubr.bf16.gmra.mxu0 %v257
    %v459 = vpop.f32.mrf.mxu0
    %v460 = vadd.f32 0.0, %v459
    %v461 = vpop.f32.mrf.mxu0
    %v462 = vpop.f32.mrf.mxu0
    %v463 = vadd.f32 0.0, %v462
    %v464 = vpop.f32.mrf.mxu0
    %465 = vmatprep.mubr.bf16.mxu0 0
    %466 = vmatmul.mubr.bf16.gmra.mxu0 %v258
    %v467 = vpop.f32.mrf.mxu0
    %v468 = vadd.f32 0.0, %v467
    %v469 = vpop.f32.mrf.mxu0
    %v470 = vpop.f32.mrf.mxu0
    %v471 = vadd.f32 0.0, %v470
    %v472 = vpop.f32.mrf.mxu0
    %473 = vmatprep.mubr.bf16.mxu0 0
    %474 = vmatmul.mubr.bf16.gmra.mxu0 %v259
    %v475 = vpop.f32.mrf.mxu0
    %v476 = vadd.f32 0.0, %v475
    %v477 = vpop.f32.mrf.mxu0
    %v478 = vpop.f32.mrf.mxu0
    %v479 = vadd.f32 0.0, %v478
    %v480 = vpop.f32.mrf.mxu0
    %481 = vmatprep.mubr.bf16.mxu0 0
    %482 = vmatmul.mubr.bf16.gmra.mxu0 %v260
    %v483 = vpop.f32.mrf.mxu0
    %v484 = vadd.f32 0.0, %v483
    %v485 = vpop.f32.mrf.mxu0
    %v486 = vpop.f32.mrf.mxu0
    %v487 = vadd.f32 0.0, %v486
    %v488 = vpop.f32.mrf.mxu0
    %489 = vmatprep.mubr.bf16.mxu0 0
    %490 = vmatmul.mubr.bf16.gmra.mxu0 %v261
    %v491 = vpop.f32.mrf.mxu0
    %v492 = vadd.f32 0.0, %v491
    %v493 = vpop.f32.mrf.mxu0
    %v494 = vpop.f32.mrf.mxu0
    %v495 = vadd.f32 0.0, %v494
    %v496 = vpop.f32.mrf.mxu0
    %497 = vmatprep.mubr.bf16.mxu0 0
    %498 = vmatmul.mubr.bf16.gmra.mxu0 %v262
    %v499 = vpop.f32.mrf.mxu0
    %v500 = vadd.f32 0.0, %v499
    %v501 = vpop.f32.mrf.mxu0
    %v502 = vpop.f32.mrf.mxu0
    %v503 = vadd.f32 0.0, %v502
    %v504 = vpop.f32.mrf.mxu0
    %505 = vmatprep.mubr.bf16.mxu0 0
    %506 = vmatmul.mubr.bf16.gmra.mxu0 %v263
    %v507 = vpop.f32.mrf.mxu0
    %v508 = vadd.f32 0.0, %v507
    %v509 = vpop.f32.mrf.mxu0
    %v510 = vpop.f32.mrf.mxu0
    %v511 = vadd.f32 0.0, %v510
    %v512 = vpop.f32.mrf.mxu0
    %513 = vmatprep.mubr.bf16.mxu0 0
    %514 = vmatmul.mubr.bf16.gmra.mxu0 %v264
    %v515 = vpop.f32.mrf.mxu0
    %v516 = vadd.f32 0.0, %v515
    %v517 = vpop.f32.mrf.mxu0
    %v518 = vpop.f32.mrf.mxu0
    %v519 = vadd.f32 0.0, %v518
    %v520 = vpop.f32.mrf.mxu0
    %521 = vmatprep.mubr.bf16.mxu0 0
    %522 = vmatmul.mubr.bf16.gmra.mxu0 %v265
    %v523 = vpop.f32.mrf.mxu0
    %v524 = vadd.f32 0.0, %v523
    %v525 = vpop.f32.mrf.mxu0
    %v526 = vpop.f32.mrf.mxu0
    %v527 = vadd.f32 0.0, %v526
    %v528 = vpop.f32.mrf.mxu0
    %529 = vmatprep.mubr.bf16.mxu0 0
    %530 = vmatmul.mubr.bf16.gmra.mxu0 %v266
    %v531 = vpop.f32.mrf.mxu0
    %v532 = vadd.f32 0.0, %v531
    %v533 = vpop.f32.mrf.mxu0
    %v534 = vpop.f32.mrf.mxu0
    %v535 = vadd.f32 0.0, %v534
    %v536 = vpop.f32.mrf.mxu0
    %537 = vmatprep.mubr.bf16.mxu0 0
    %538 = vmatmul.mubr.bf16.gmra.mxu0 %v267
    %v539 = vpop.f32.mrf.mxu0
    %v540 = vadd.f32 0.0, %v539
    %v541 = vpop.f32.mrf.mxu0
    %v542 = vpop.f32.mrf.mxu0
    %v543 = vadd.f32 0.0, %v542
    %v544 = vpop.f32.mrf.mxu0
    %545 = vmatprep.mubr.bf16.mxu0 0
    %546 = vmatmul.mubr.bf16.gmra.mxu0 %v268
    %v547 = vpop.f32.mrf.mxu0
    %v548 = vadd.f32 0.0, %v547
    %v549 = vpop.f32.mrf.mxu0
    %v550 = vpop.f32.mrf.mxu0
    %v551 = vadd.f32 0.0, %v550
    %v552 = vpop.f32.mrf.mxu0
    %553 = vmatprep.mubr.bf16.mxu0 0
    %554 = vmatmul.mubr.bf16.gmra.mxu0 %v269
    %v555 = vpop.f32.mrf.mxu0
    %v556 = vadd.f32 0.0, %v555
    %v557 = vpop.f32.mrf.mxu0
    %v558 = vpop.f32.mrf.mxu0
    %v559 = vadd.f32 0.0, %v558
    %v560 = vpop.f32.mrf.mxu0
    %561 = vmatprep.mubr.bf16.mxu0 0
    %562 = vmatmul.mubr.bf16.gmra.mxu0 %v270
    %v563 = vpop.f32.mrf.mxu0
    %v564 = vadd.f32 0.0, %v563
    %v565 = vpop.f32.mrf.mxu0
    %v566 = vpop.f32.mrf.mxu0
    %v567 = vadd.f32 0.0, %v566
    %v568 = vpop.f32.mrf.mxu0
    %569 = vmatprep.mubr.bf16.mxu0 0
    %570 = vmatmul.mubr.bf16.gmra.mxu0 %v271
    %v571 = vpop.f32.mrf.mxu0
    %v572 = vadd.f32 0.0, %v571
    %v573 = vpop.f32.mrf.mxu0
    %v574 = vpop.f32.mrf.mxu0
    %v575 = vadd.f32 0.0, %v574
    %v576 = vpop.f32.mrf.mxu0
    %577 = vmatprep.mubr.bf16.mxu0 0
    %578 = vmatmul.mubr.bf16.gmra.mxu0 %v272
    %v579 = vpop.f32.mrf.mxu0
    %v580 = vadd.f32 0.0, %v579
    %v581 = vpop.f32.mrf.mxu0
    %v582 = vpop.f32.mrf.mxu0
    %v583 = vadd.f32 0.0, %v582
    %v584 = vpop.f32.mrf.mxu0
    %585 = vmatprep.mubr.bf16.mxu0 0
    %586 = vmatmul.mubr.bf16.gmra.mxu0 %v273
    %v587 = vpop.f32.mrf.mxu0
    %v588 = vadd.f32 0.0, %v587
    %v589 = vpop.f32.mrf.mxu0
    %v590 = vpop.f32.mrf.mxu0
    %v591 = vadd.f32 0.0, %v590
    %v592 = vpop.f32.mrf.mxu0
    %593 = vmatprep.mubr.bf16.mxu0 0
    %594 = vmatmul.mubr.bf16.gmra.mxu0 %v274
    %v595 = vpop.f32.mrf.mxu0
    %v596 = vadd.f32 0.0, %v595
    %v597 = vpop.f32.mrf.mxu0
    %v598 = vpop.f32.mrf.mxu0
    %v599 = vadd.f32 0.0, %v598
    %v600 = vpop.f32.mrf.mxu0
    %601 = vmatprep.mubr.bf16.mxu0 0
    %602 = vmatmul.mubr.bf16.gmra.mxu0 %v275
    %v603 = vpop.f32.mrf.mxu0
    %v604 = vadd.f32 0.0, %v603
    %v605 = vpop.f32.mrf.mxu0
    %v606 = vpop.f32.mrf.mxu0
    %v607 = vadd.f32 0.0, %v606
    %v608 = vpop.f32.mrf.mxu0
    %609 = vmatprep.mubr.bf16.mxu0 0
    %610 = vmatmul.mubr.bf16.gmra.mxu0 %v276
    %v611 = vpop.f32.mrf.mxu0
    %v612 = vadd.f32 0.0, %v611
    %v613 = vpop.f32.mrf.mxu0
    %v614 = vpop.f32.mrf.mxu0
    %v615 = vadd.f32 0.0, %v614
    %v616 = vpop.f32.mrf.mxu0
    %617 = vmatprep.mubr.bf16.mxu0 0
    %618 = vmatmul.mubr.bf16.gmra.mxu0 %v277
    %v619 = vpop.f32.mrf.mxu0
    %v620 = vadd.f32 0.0, %v619
    %v621 = vpop.f32.mrf.mxu0
    %v622 = vpop.f32.mrf.mxu0
    %v623 = vadd.f32 0.0, %v622
    %v624 = vpop.f32.mrf.mxu0
    %625 = vmatprep.mubr.bf16.mxu0 0
    %626 = vmatmul.mubr.bf16.gmra.mxu0 %v278
    %v627 = vpop.f32.mrf.mxu0
    %v628 = vadd.f32 0.0, %v627
    %v629 = vpop.f32.mrf.mxu0
    %v630 = vpop.f32.mrf.mxu0
    %v631 = vadd.f32 0.0, %v630
    %v632 = vpop.f32.mrf.mxu0
    %633 = vmatprep.mubr.bf16.mxu0 0
    %634 = vmatmul.mubr.bf16.gmra.mxu0 %v279
    %v635 = vpop.f32.mrf.mxu0
    %v636 = vadd.f32 0.0, %v635
    %v637 = vpop.f32.mrf.mxu0
    %v638 = vpop.f32.mrf.mxu0
    %v639 = vadd.f32 0.0, %v638
    %v640 = vpop.f32.mrf.mxu0
    %641 = vmatprep.mubr.bf16.mxu0 0
    %642 = vmatmul.mubr.bf16.gmra.mxu0 %v280
    %v643 = vpop.f32.mrf.mxu0
    %v644 = vadd.f32 0.0, %v643
    %v645 = vpop.f32.mrf.mxu0
    %v646 = vpop.f32.mrf.mxu0
    %v647 = vadd.f32 0.0, %v646
    %v648 = vpop.f32.mrf.mxu0
    %649 = vdwg.mxu0
    %v650 = vpack.c.bf16 %v399, %v396
    %v651 = vpack.c.bf16 %v407, %v404
    %v652 = vpack.c.bf16 %v415, %v412
    %v653 = vpack.c.bf16 %v423, %v420
    %v654 = vpack.c.bf16 %v431, %v428
    %v655 = vpack.c.bf16 %v439, %v436
    %v656 = vpack.c.bf16 %v447, %v444
    %v657 = vpack.c.bf16 %v455, %v452
    %v658 = vpack.c.bf16 %v463, %v460
    %v659 = vpack.c.bf16 %v471, %v468
    %v660 = vpack.c.bf16 %v479, %v476
    %v661 = vpack.c.bf16 %v487, %v484
    %v662 = vpack.c.bf16 %v495, %v492
    %v663 = vpack.c.bf16 %v503, %v500
    %v664 = vpack.c.bf16 %v511, %v508
    %v665 = vpack.c.bf16 %v519, %v516
    %v666 = vpack.c.bf16 %v527, %v524
    %v667 = vpack.c.bf16 %v535, %v532
    %v668 = vpack.c.bf16 %v543, %v540
    %v669 = vpack.c.bf16 %v551, %v548
    %v670 = vpack.c.bf16 %v559, %v556
    %v671 = vpack.c.bf16 %v567, %v564
    %v672 = vpack.c.bf16 %v575, %v572
    %v673 = vpack.c.bf16 %v583, %v580
    %v674 = vpack.c.bf16 %v591, %v588
    %v675 = vpack.c.bf16 %v599, %v596
    %v676 = vpack.c.bf16 %v607, %v604
    %v677 = vpack.c.bf16 %v615, %v612
    %v678 = vpack.c.bf16 %v623, %v620
    %v679 = vpack.c.bf16 %v631, %v628
    %v680 = vpack.c.bf16 %v639, %v636
    %v681 = vpack.c.bf16 %v647, %v644
    %v714 = vunpack.c.l.b16 %v650
    %v715 = vunpack.c.h.b16 %v650
    %v716 = vunpack.c.l.b16 %v651
    %v717 = vunpack.c.h.b16 %v651
    %v718 = vunpack.c.l.b16 %v652
    %v719 = vunpack.c.h.b16 %v652
    %v720 = vunpack.c.l.b16 %v653
    %v721 = vunpack.c.h.b16 %v653
    %v722 = vunpack.c.l.b16 %v654
    %v723 = vunpack.c.h.b16 %v654
    %v724 = vunpack.c.l.b16 %v655
    %v725 = vunpack.c.h.b16 %v655
    %v726 = vunpack.c.l.b16 %v656
    %v727 = vunpack.c.h.b16 %v656
    %v728 = vunpack.c.l.b16 %v657
    %v729 = vunpack.c.h.b16 %v657
    %v730 = vunpack.c.l.b16 %v658
    %v731 = vunpack.c.h.b16 %v658
    %v732 = vunpack.c.l.b16 %v659
    %v733 = vunpack.c.h.b16 %v659
    %v734 = vunpack.c.l.b16 %v660
    %v735 = vunpack.c.h.b16 %v660
    %v736 = vunpack.c.l.b16 %v661
    %v737 = vunpack.c.h.b16 %v661
    %v738 = vunpack.c.l.b16 %v662
    %v739 = vunpack.c.h.b16 %v662
    %v740 = vunpack.c.l.b16 %v663
    %v741 = vunpack.c.h.b16 %v663
    %v742 = vunpack.c.l.b16 %v664
    %v743 = vunpack.c.h.b16 %v664
    %v744 = vunpack.c.l.b16 %v665
    %v745 = vunpack.c.h.b16 %v665
    %v746 = vunpack.c.l.b16 %v666
    %v747 = vunpack.c.h.b16 %v666
    %v748 = vunpack.c.l.b16 %v667
    %v749 = vunpack.c.h.b16 %v667
    %v750 = vunpack.c.l.b16 %v668
    %v751 = vunpack.c.h.b16 %v668
    %v752 = vunpack.c.l.b16 %v669
    %v753 = vunpack.c.h.b16 %v669
    %v754 = vunpack.c.l.b16 %v670
    %v755 = vunpack.c.h.b16 %v670
    %v756 = vunpack.c.l.b16 %v671
    %v757 = vunpack.c.h.b16 %v671
    %v758 = vunpack.c.l.b16 %v672
    %v759 = vunpack.c.h.b16 %v672
    %v760 = vunpack.c.l.b16 %v673
    %v761 = vunpack.c.h.b16 %v673
    %v762 = vunpack.c.l.b16 %v674
    %v763 = vunpack.c.h.b16 %v674
    %v764 = vunpack.c.l.b16 %v675
    %v765 = vunpack.c.h.b16 %v675
    %v766 = vunpack.c.l.b16 %v676
    %v767 = vunpack.c.h.b16 %v676
    %v768 = vunpack.c.l.b16 %v677
    %v769 = vunpack.c.h.b16 %v677
    %v770 = vunpack.c.l.b16 %v678
    %v771 = vunpack.c.h.b16 %v678
    %v772 = vunpack.c.l.b16 %v679
    %v773 = vunpack.c.h.b16 %v679
    %v774 = vunpack.c.l.b16 %v680
    %v775 = vunpack.c.h.b16 %v680
    %v776 = vunpack.c.l.b16 %v681
    %v777 = vunpack.c.h.b16 %v681
    %v778 = vpack.c.b16 %v714, %v714
    %v779 = vpack.c.b16 %v715, %v715
    %v780 = vpack.c.b16 %v716, %v716
    %v781 = vpack.c.b16 %v717, %v717
    %v782 = vpack.c.b16 %v718, %v718
    %v783 = vpack.c.b16 %v719, %v719
    %v784 = vpack.c.b16 %v720, %v720
    %v785 = vpack.c.b16 %v721, %v721
    %v786 = vpack.c.b16 %v722, %v722
    %v787 = vpack.c.b16 %v723, %v723
    %v788 = vpack.c.b16 %v724, %v724
    %v789 = vpack.c.b16 %v725, %v725
    %v790 = vpack.c.b16 %v726, %v726
    %v791 = vpack.c.b16 %v727, %v727
    %v792 = vpack.c.b16 %v728, %v728
    %v793 = vpack.c.b16 %v729, %v729
    %v794 = vpack.c.b16 %v730, %v730
    %v795 = vpack.c.b16 %v731, %v731
    %v796 = vpack.c.b16 %v732, %v732
    %v797 = vpack.c.b16 %v733, %v733
    %v798 = vpack.c.b16 %v734, %v734
    %v799 = vpack.c.b16 %v735, %v735
    %v800 = vpack.c.b16 %v736, %v736
    %v801 = vpack.c.b16 %v737, %v737
    %v802 = vpack.c.b16 %v738, %v738
    %v803 = vpack.c.b16 %v739, %v739
    %v804 = vpack.c.b16 %v740, %v740
    %v805 = vpack.c.b16 %v741, %v741
    %v806 = vpack.c.b16 %v742, %v742
    %v807 = vpack.c.b16 %v743, %v743
    %v808 = vpack.c.b16 %v744, %v744
    %v809 = vpack.c.b16 %v745, %v745
    %v810 = vpack.c.b16 %v746, %v746
    %v811 = vpack.c.b16 %v747, %v747
    %v812 = vpack.c.b16 %v748, %v748
    %v813 = vpack.c.b16 %v749, %v749
    %v814 = vpack.c.b16 %v750, %v750
    %v815 = vpack.c.b16 %v751, %v751
    %v816 = vpack.c.b16 %v752, %v752
    %v817 = vpack.c.b16 %v753, %v753
    %v818 = vpack.c.b16 %v754, %v754
    %v819 = vpack.c.b16 %v755, %v755
    %v820 = vpack.c.b16 %v756, %v756
    %v821 = vpack.c.b16 %v757, %v757
    %v822 = vpack.c.b16 %v758, %v758
    %v823 = vpack.c.b16 %v759, %v759
    %v824 = vpack.c.b16 %v760, %v760
    %v825 = vpack.c.b16 %v761, %v761
    %v826 = vpack.c.b16 %v762, %v762
    %v827 = vpack.c.b16 %v763, %v763
    %v828 = vpack.c.b16 %v764, %v764
    %v829 = vpack.c.b16 %v765, %v765
    %v830 = vpack.c.b16 %v766, %v766
    %v831 = vpack.c.b16 %v767, %v767
    %v832 = vpack.c.b16 %v768, %v768
    %v833 = vpack.c.b16 %v769, %v769
    %v834 = vpack.c.b16 %v770, %v770
    %v835 = vpack.c.b16 %v771, %v771
    %v836 = vpack.c.b16 %v772, %v772
    %v837 = vpack.c.b16 %v773, %v773
    %v838 = vpack.c.b16 %v774, %v774
    %v839 = vpack.c.b16 %v775, %v775
    %v840 = vpack.c.b16 %v776, %v776
    %v841 = vpack.c.b16 %v777, %v777
    %906 = vst [vmem:[#allocation7] sm:$0xf] %v778
    %907 = vst [vmem:[#allocation7 + $0x4] sm:$0xf] %v779
    %908 = vst [vmem:[#allocation7 + $0x8] sm:$0xf] %v780
    %909 = vst [vmem:[#allocation7 + $0xc] sm:$0xf] %v781
    %910 = vst [vmem:[#allocation7 + $0x10] sm:$0xf] %v782
    %911 = vst [vmem:[#allocation7 + $0x14] sm:$0xf] %v783
    %912 = vst [vmem:[#allocation7 + $0x18] sm:$0xf] %v784
    %913 = vst [vmem:[#allocation7 + $0x1c] sm:$0xf] %v785
    %914 = vst [vmem:[#allocation7 + $0x20] sm:$0xf] %v786
    %915 = vst [vmem:[#allocation7 + $0x24] sm:$0xf] %v787
    %916 = vst [vmem:[#allocation7 + $0x28] sm:$0xf] %v788
    %917 = vst [vmem:[#allocation7 + $0x2c] sm:$0xf] %v789
    %918 = vst [vmem:[#allocation7 + $0x30] sm:$0xf] %v790
    %919 = vst [vmem:[#allocation7 + $0x34] sm:$0xf] %v791
    %920 = vst [vmem:[#allocation7 + $0x38] sm:$0xf] %v792
    %921 = vst [vmem:[#allocation7 + $0x3c] sm:$0xf] %v793
    %922 = vst [vmem:[#allocation7 + $0x40] sm:$0xf] %v794
    %923 = vst [vmem:[#allocation7 + $0x44] sm:$0xf] %v795
    %924 = vst [vmem:[#allocation7 + $0x48] sm:$0xf] %v796
    %925 = vst [vmem:[#allocation7 + $0x4c] sm:$0xf] %v797
    %926 = vst [vmem:[#allocation7 + $0x50] sm:$0xf] %v798
    %927 = vst [vmem:[#allocation7 + $0x54] sm:$0xf] %v799
    %928 = vst [vmem:[#allocation7 + $0x58] sm:$0xf] %v800
    %929 = vst [vmem:[#allocation7 + $0x5c] sm:$0xf] %v801
    %930 = vst [vmem:[#allocation7 + $0x60] sm:$0xf] %v802
    %931 = vst [vmem:[#allocation7 + $0x64] sm:$0xf] %v803
    %932 = vst [vmem:[#allocation7 + $0x68] sm:$0xf] %v804
    %933 = vst [vmem:[#allocation7 + $0x6c] sm:$0xf] %v805
    %934 = vst [vmem:[#allocation7 + $0x70] sm:$0xf] %v806
    %935 = vst [vmem:[#allocation7 + $0x74] sm:$0xf] %v807
    %936 = vst [vmem:[#allocation7 + $0x78] sm:$0xf] %v808
    %937 = vst [vmem:[#allocation7 + $0x7c] sm:$0xf] %v809
    %938 = vst [vmem:[#allocation7 + $0x80] sm:$0xf] %v810
    %939 = vst [vmem:[#allocation7 + $0x84] sm:$0xf] %v811
    %940 = vst [vmem:[#allocation7 + $0x88] sm:$0xf] %v812
    %941 = vst [vmem:[#allocation7 + $0x8c] sm:$0xf] %v813
    %942 = vst [vmem:[#allocation7 + $0x90] sm:$0xf] %v814
    %943 = vst [vmem:[#allocation7 + $0x94] sm:$0xf] %v815
    %944 = vst [vmem:[#allocation7 + $0x98] sm:$0xf] %v816
    %945 = vst [vmem:[#allocation7 + $0x9c] sm:$0xf] %v817
    %946 = vst [vmem:[#allocation7 + $0xa0] sm:$0xf] %v818
    %947 = vst [vmem:[#allocation7 + $0xa4] sm:$0xf] %v819
    %948 = vst [vmem:[#allocation7 + $0xa8] sm:$0xf] %v820
    %949 = vst [vmem:[#allocation7 + $0xac] sm:$0xf] %v821
    %950 = vst [vmem:[#allocation7 + $0xb0] sm:$0xf] %v822
    %951 = vst [vmem:[#allocation7 + $0xb4] sm:$0xf] %v823
    %952 = vst [vmem:[#allocation7 + $0xb8] sm:$0xf] %v824
    %953 = vst [vmem:[#allocation7 + $0xbc] sm:$0xf] %v825
    %954 = vst [vmem:[#allocation7 + $0xc0] sm:$0xf] %v826
    %955 = vst [vmem:[#allocation7 + $0xc4] sm:$0xf] %v827
    %956 = vst [vmem:[#allocation7 + $0xc8] sm:$0xf] %v828
    %957 = vst [vmem:[#allocation7 + $0xcc] sm:$0xf] %v829
    %958 = vst [vmem:[#allocation7 + $0xd0] sm:$0xf] %v830
    %959 = vst [vmem:[#allocation7 + $0xd4] sm:$0xf] %v831
    %960 = vst [vmem:[#allocation7 + $0xd8] sm:$0xf] %v832
    %961 = vst [vmem:[#allocation7 + $0xdc] sm:$0xf] %v833
    %962 = vst [vmem:[#allocation7 + $0xe0] sm:$0xf] %v834
    %963 = vst [vmem:[#allocation7 + $0xe4] sm:$0xf] %v835
    %964 = vst [vmem:[#allocation7 + $0xe8] sm:$0xf] %v836
    %965 = vst [vmem:[#allocation7 + $0xec] sm:$0xf] %v837
    %966 = vst [vmem:[#allocation7 + $0xf0] sm:$0xf] %v838
    %967 = vst [vmem:[#allocation7 + $0xf4] sm:$0xf] %v839
    %968 = vst [vmem:[#allocation7 + $0xf8] sm:$0xf] %v840
    %969 = vst [vmem:[#allocation7 + $0xfc] sm:$0xf] %v841
    // Predicated region
    $region18: #{tpu_custom_call.1} parent=1 // pred_check
      _
    $region19: #{tpu_custom_call.1} parent=1 // pred_check_branch
      %971 = sbr.rel (0) target = $region21
    $region20: #{tpu_custom_call.1} parent=1 // pred_region
      %s973 = ssub.s32 4096, 4096
      %974 = vsyncadd [#allocation4], %s973
      %s975 = sshll.u32 [#allocation7], 4
      %s976 = int_to_ptr.vmem [resolvable:$true] %s975
      %981 = dma.vmem_to_hbm [thread:$0]  %s976, 4096, %s2, [#allocation4], 64, 64, 4
    $region21: #{tpu_custom_call.1} parent=1 // pred_fallthru
      _
    // Predicated region
    $region22: #{tpu_custom_call.1} parent=1 // pred_check
      _
    $region23: #{tpu_custom_call.1} parent=1 // pred_check_branch
      %983 = sbr.rel (0) target = $region25
    $region24: #{tpu_custom_call.1} parent=1 // pred_region
      %984 = dma.done [#allocation4], 4096
    $region25: #{tpu_custom_call.1} parent=1 // pred_fallthru
      _
    %985 = vsyncpa [#allocation3], 1
    %986 = vsyncpa [#allocation6], 1
    %987 = vsyncpa [#allocation4], 1

</llo_original>
